<compile_context>
chip_gen: v6e
topology: v6e:2x2x1
jax: 0.10.0
libtpu: 0.0.40
codegen_flags: <defaults>
</compile_context>

<pallas_src>
import functools

import jax
import jax.numpy as jnp
from jax.experimental import pallas as pl
from jax.experimental.pallas import tpu as pltpu


def _mlp_kernel(x_ref, w1_ref, b1_ref, w2_ref, b2_ref, w3_ref, b3_ref,
                w4_ref, b4_ref, o_ref):
    """One batch tile. x_ref: (n_in, TB) feature-major; o_ref: (n_out, TB)."""
    cdt = w1_ref.dtype  # streaming/compute dtype (f32 or bf16)

    # hidden1 + relu   (MXU matmul with f32 accumulation; bias+ReLU in f32)
    h = jnp.dot(w1_ref[...], x_ref[...], preferred_element_type=jnp.float32)
    h = jnp.maximum(h + b1_ref[...], 0.0)

    # hidden2 + relu
    h = jnp.dot(w2_ref[...], h.astype(cdt), preferred_element_type=jnp.float32)
    h = jnp.maximum(h + b2_ref[...], 0.0)

    # hidden3 + relu
    h = jnp.dot(w3_ref[...], h.astype(cdt), preferred_element_type=jnp.float32)
    h = jnp.maximum(h + b3_ref[...], 0.0)

    # out (no activation)
    h = jnp.dot(w4_ref[...], h.astype(cdt), preferred_element_type=jnp.float32)
    o_ref[...] = (h + b4_ref[...]).astype(o_ref.dtype)


def _round_up(v, m):
    return ((v + m - 1) // m) * m


@functools.partial(jax.jit, static_argnames=("compute_dtype", "max_tile"))
def dde_net_fc_forward(x, params, *, compute_dtype=jnp.float32, max_tile=2048):
    """x: (B, n_in) float32.  params: PyTorch-native w:(out,in), b:(out,1) f32.

    Returns (B, n_out) float32, matching dde_net_fc.forward.
    """
    B, n_in = x.shape
    n_hid = params["w1"].shape[0]
    n_out = params["w4"].shape[0]

    # Batch tile: multiple of 128 lanes.  Single grid step whenever the whole
    # (padded) batch fits in max_tile lanes; otherwise stream max_tile chunks.
    tb = min(max_tile, _round_up(B, 128))
    b_pad = _round_up(B, tb)

    # Lane-dense activation layout: batch on the lane (last) axis.  The
    # transpose / cast / zero-pad fuse into a single XLA pass over x.
    xt = jnp.transpose(x).astype(compute_dtype)          # (n_in, B)
    if b_pad != B:
        xt = jnp.pad(xt, ((0, 0), (0, b_pad - B)))       # zero-pad extra lanes

    wcast = lambda w: w.astype(compute_dtype)
    resident = lambda shape: pl.BlockSpec(shape, lambda i: (0, 0))

    out_t = pl.pallas_call(
        _mlp_kernel,
        out_shape=jax.ShapeDtypeStruct((n_out, b_pad), jnp.float32),
        grid=(b_pad // tb,),
        in_specs=[
            pl.BlockSpec((n_in, tb), lambda i: (0, i)),      # x: streamed
            resident((n_hid, n_in)), resident((n_hid, 1)),   # w1, b1 (resident)
            resident((n_hid, n_hid)), resident((n_hid, 1)),  # w2, b2
            resident((n_hid, n_hid)), resident((n_hid, 1)),  # w3, b3
            resident((n_out, n_hid)), resident((n_out, 1)),  # w4, b4
        ],
        out_specs=pl.BlockSpec((n_out, tb), lambda i: (0, i)),
        compiler_params=pltpu.CompilerParams(
            dimension_semantics=("parallel",)),              # megacore on v7x
    )(xt,
      wcast(params["w1"]), params["b1"],
      wcast(params["w2"]), params["b2"],
      wcast(params["w3"]), params["b3"],
      wcast(params["w4"]), params["b4"])

    return jnp.transpose(out_t)[:B]                          # back to (B, n_out)


def init_params(key, n_in, n_hid, n_out):
    """Deterministic init matching PyTorch Linear (native (out,in) weights)."""
    ks = jax.random.split(key, 8)

    def linear(kw, kb, fan_in, fan_out):
        bound = float(fan_in) ** -0.5
        w = jax.random.uniform(kw, (fan_out, fan_in), jnp.float32, -bound, bound)
        b = jax.random.uniform(kb, (fan_out, 1), jnp.float32, -bound, bound)
        return w, b

    w1, b1 = linear(ks[0], ks[1], n_in, n_hid)
    w2, b2 = linear(ks[2], ks[3], n_hid, n_hid)
    w3, b3 = linear(ks[4], ks[5], n_hid, n_hid)
    w4, b4 = linear(ks[6], ks[7], n_hid, n_out)
    return {"w1": w1, "b1": b1, "w2": w2, "b2": b2,
            "w3": w3, "b3": b3, "w4": w4, "b4": b4}


def reference_forward(x, p):
    def lin(h, w, b):
        return h @ w.T + b.T
    h = jnp.maximum(lin(x, p["w1"], p["b1"]), 0.0)
    h = jnp.maximum(lin(h, p["w2"], p["b2"]), 0.0)
    h = jnp.maximum(lin(h, p["w3"], p["b3"]), 0.0)
    return lin(h, p["w4"], p["b4"])


if __name__ == "__main__":
    key = jax.random.PRNGKey(0)
    k_x, k_x2, k_p = jax.random.split(key, 3)

    n_in, n_hid, n_out = 16, 32, 4
    params = init_params(k_p, n_in, n_hid, n_out)

    # Small batch (toy module shape): single 128-lane tile, f32 path.
    x_small = jax.random.normal(k_x, (8, n_in), jnp.float32)
    out_small = jax.block_until_ready(dde_net_fc_forward(x_small, params))
    ref_small = reference_forward(x_small, params)
    assert out_small.shape == (8, n_out)
    assert jnp.allclose(out_small, ref_small, atol=1e-4, rtol=1e-4)

    # Larger batch: exercises padding + single large lane tile.
    x_big = jax.random.normal(k_x2, (1000, n_in), jnp.float32)
    out_big = jax.block_until_ready(dde_net_fc_forward(x_big, params))
    ref_big = reference_forward(x_big, params)
    assert out_big.shape == (1000, n_out)
    assert jnp.allclose(out_big, ref_big, atol=1e-4, rtol=1e-4)

    # Multi-tile grid (batch exceeds max_tile lanes) + "parallel" axis.
    x_multi = jax.random.normal(k_x2, (5000, n_in), jnp.float32)
    out_multi = jax.block_until_ready(dde_net_fc_forward(x_multi, params))
    ref_multi = reference_forward(x_multi, params)
    assert out_multi.shape == (5000, n_out)
    assert jnp.allclose(out_multi, ref_multi, atol=1e-4, rtol=1e-4)

    # bf16 streaming path (v6e/v7x memory-bandwidth lever), f32 accumulation.
    out_bf16 = jax.block_until_ready(
        dde_net_fc_forward(x_big, params, compute_dtype=jnp.bfloat16))
    assert out_bf16.shape == (1000, n_out)
    assert jnp.allclose(out_bf16, ref_big, atol=5e-2, rtol=5e-2)

    print("KERNEL_OK")
</pallas_src>

<mosaic_0001>
module attributes {stable_mosaic.version = 11 : i64} {
  func.func @_mlp_kernel(%arg0: i32, %arg1: memref<16x128xf32, #tpu.memory_space<vmem>>, %arg2: memref<32x16xf32, #tpu.memory_space<vmem>>, %arg3: memref<32x1xf32, #tpu.memory_space<vmem>>, %arg4: memref<32x32xf32, #tpu.memory_space<vmem>>, %arg5: memref<32x1xf32, #tpu.memory_space<vmem>>, %arg6: memref<32x32xf32, #tpu.memory_space<vmem>>, %arg7: memref<32x1xf32, #tpu.memory_space<vmem>>, %arg8: memref<4x32xf32, #tpu.memory_space<vmem>>, %arg9: memref<4x1xf32, #tpu.memory_space<vmem>>, %arg10: memref<4x128xf32, #tpu.memory_space<vmem>>) attributes {dimension_semantics = [#tpu.dimension_semantics<parallel>], iteration_bounds = array<i64: 1>, scalar_prefetch = 0 : i64, scratch_operands = 0 : i64, tpu.core_type = #tpu.core_type<tc>, window_params = [{transform_indices = @transform_0, window_bounds = array<i64: 16, 128>}, {pipeline_mode = #tpu.pipeline_mode<synchronous>, transform_indices = @transform_1, window_bounds = array<i64: 32, 16>}, {pipeline_mode = #tpu.pipeline_mode<synchronous>, transform_indices = @transform_2, window_bounds = array<i64: 32, 1>}, {pipeline_mode = #tpu.pipeline_mode<synchronous>, transform_indices = @transform_3, window_bounds = array<i64: 32, 32>}, {pipeline_mode = #tpu.pipeline_mode<synchronous>, transform_indices = @transform_4, window_bounds = array<i64: 32, 1>}, {pipeline_mode = #tpu.pipeline_mode<synchronous>, transform_indices = @transform_5, window_bounds = array<i64: 32, 32>}, {pipeline_mode = #tpu.pipeline_mode<synchronous>, transform_indices = @transform_6, window_bounds = array<i64: 32, 1>}, {pipeline_mode = #tpu.pipeline_mode<synchronous>, transform_indices = @transform_7, window_bounds = array<i64: 4, 32>}, {pipeline_mode = #tpu.pipeline_mode<synchronous>, transform_indices = @transform_8, window_bounds = array<i64: 4, 1>}, {transform_indices = @transform_9, window_bounds = array<i64: 4, 128>}]} {
    %c0 = arith.constant 0 : index
    %c0_0 = arith.constant 0 : index
    %0 = vector.load %arg2[%c0, %c0_0] : memref<32x16xf32, #tpu.memory_space<vmem>>, vector<32x16xf32>
    %c0_1 = arith.constant 0 : index
    %c0_2 = arith.constant 0 : index
    %1 = vector.load %arg1[%c0_1, %c0_2] : memref<16x128xf32, #tpu.memory_space<vmem>>, vector<16x128xf32>
    %cst = arith.constant dense<0.000000e+00> : vector<32x128xf32>
    %2 = tpu.matmul %0, %1, %cst {dimension_numbers = #tpu.dot_dimension_numbers<[1], [0], [0], [1], [0, 0, 1, 1], [], []>} : vector<32x16xf32>, vector<16x128xf32>, vector<32x128xf32> -> vector<32x128xf32>
    %c0_3 = arith.constant 0 : index
    %c0_4 = arith.constant 0 : index
    %3 = vector.load %arg3[%c0_3, %c0_4] : memref<32x1xf32, #tpu.memory_space<vmem>>, vector<32x1xf32>
    %4 = vector.broadcast %3 : vector<32x1xf32> to vector<32x128xf32>
    %5 = arith.addf %2, %4 : vector<32x128xf32>
    %cst_5 = arith.constant 0.000000e+00 : f32
    %6 = vector.broadcast %cst_5 : f32 to vector<32x128xf32>
    %7 = arith.maximumf %5, %6 : vector<32x128xf32>
    %c0_6 = arith.constant 0 : index
    %c0_7 = arith.constant 0 : index
    %8 = vector.load %arg4[%c0_6, %c0_7] : memref<32x32xf32, #tpu.memory_space<vmem>>, vector<32x32xf32>
    %cst_8 = arith.constant dense<0.000000e+00> : vector<32x128xf32>
    %9 = tpu.matmul %8, %7, %cst_8 {dimension_numbers = #tpu.dot_dimension_numbers<[1], [0], [0], [1], [0, 0, 1, 1], [], []>} : vector<32x32xf32>, vector<32x128xf32>, vector<32x128xf32> -> vector<32x128xf32>
    %c0_9 = arith.constant 0 : index
    %c0_10 = arith.constant 0 : index
    %10 = vector.load %arg5[%c0_9, %c0_10] : memref<32x1xf32, #tpu.memory_space<vmem>>, vector<32x1xf32>
    %11 = vector.broadcast %10 : vector<32x1xf32> to vector<32x128xf32>
    %12 = arith.addf %9, %11 : vector<32x128xf32>
    %cst_11 = arith.constant 0.000000e+00 : f32
    %13 = vector.broadcast %cst_11 : f32 to vector<32x128xf32>
    %14 = arith.maximumf %12, %13 : vector<32x128xf32>
    %c0_12 = arith.constant 0 : index
    %c0_13 = arith.constant 0 : index
    %15 = vector.load %arg6[%c0_12, %c0_13] : memref<32x32xf32, #tpu.memory_space<vmem>>, vector<32x32xf32>
    %cst_14 = arith.constant dense<0.000000e+00> : vector<32x128xf32>
    %16 = tpu.matmul %15, %14, %cst_14 {dimension_numbers = #tpu.dot_dimension_numbers<[1], [0], [0], [1], [0, 0, 1, 1], [], []>} : vector<32x32xf32>, vector<32x128xf32>, vector<32x128xf32> -> vector<32x128xf32>
    %c0_15 = arith.constant 0 : index
    %c0_16 = arith.constant 0 : index
    %17 = vector.load %arg7[%c0_15, %c0_16] : memref<32x1xf32, #tpu.memory_space<vmem>>, vector<32x1xf32>
    %18 = vector.broadcast %17 : vector<32x1xf32> to vector<32x128xf32>
    %19 = arith.addf %16, %18 : vector<32x128xf32>
    %cst_17 = arith.constant 0.000000e+00 : f32
    %20 = vector.broadcast %cst_17 : f32 to vector<32x128xf32>
    %21 = arith.maximumf %19, %20 : vector<32x128xf32>
    %c0_18 = arith.constant 0 : index
    %c0_19 = arith.constant 0 : index
    %22 = vector.load %arg8[%c0_18, %c0_19] : memref<4x32xf32, #tpu.memory_space<vmem>>, vector<4x32xf32>
    %cst_20 = arith.constant dense<0.000000e+00> : vector<4x128xf32>
    %23 = tpu.matmul %22, %21, %cst_20 {dimension_numbers = #tpu.dot_dimension_numbers<[1], [0], [0], [1], [0, 0, 1, 1], [], []>} : vector<4x32xf32>, vector<32x128xf32>, vector<4x128xf32> -> vector<4x128xf32>
    %c0_21 = arith.constant 0 : index
    %c0_22 = arith.constant 0 : index
    %24 = vector.load %arg9[%c0_21, %c0_22] : memref<4x1xf32, #tpu.memory_space<vmem>>, vector<4x1xf32>
    %25 = vector.broadcast %24 : vector<4x1xf32> to vector<4x128xf32>
    %26 = arith.addf %23, %25 : vector<4x128xf32>
    %c0_23 = arith.constant 0 : index
    %c0_24 = arith.constant 0 : index
    %27 = vector.load %arg10[%c0_23, %c0_24] : memref<4x128xf32, #tpu.memory_space<vmem>>, vector<4x128xf32>
    tpu.vector_store %arg10[%c0_23, %c0_24], %26 {strides = array<i32>} : memref<4x128xf32, #tpu.memory_space<vmem>>, vector<4x128xf32>,
    return
  }
  func.func @transform_0(%arg0: i32) -> (i32, i32) {
    %c0_i32 = arith.constant 0 : i32
    %c0_i32_0 = arith.constant 0 : i32
    return %c0_i32, %arg0 : i32, i32
  }
  func.func @transform_1(%arg0: i32) -> (i32, i32) {
    %c0_i32 = arith.constant 0 : i32
    %c0_i32_0 = arith.constant 0 : i32
    %c0_i32_1 = arith.constant 0 : i32
    return %c0_i32, %c0_i32_0 : i32, i32
  }
  func.func @transform_2(%arg0: i32) -> (i32, i32) {
    %c0_i32 = arith.constant 0 : i32
    %c0_i32_0 = arith.constant 0 : i32
    %c0_i32_1 = arith.constant 0 : i32
    return %c0_i32, %c0_i32_0 : i32, i32
  }
  func.func @transform_3(%arg0: i32) -> (i32, i32) {
    %c0_i32 = arith.constant 0 : i32
    %c0_i32_0 = arith.constant 0 : i32
    %c0_i32_1 = arith.constant 0 : i32
    return %c0_i32, %c0_i32_0 : i32, i32
  }
  func.func @transform_4(%arg0: i32) -> (i32, i32) {
    %c0_i32 = arith.constant 0 : i32
    %c0_i32_0 = arith.constant 0 : i32
    %c0_i32_1 = arith.constant 0 : i32
    return %c0_i32, %c0_i32_0 : i32, i32
  }
  func.func @transform_5(%arg0: i32) -> (i32, i32) {
    %c0_i32 = arith.constant 0 : i32
    %c0_i32_0 = arith.constant 0 : i32
    %c0_i32_1 = arith.constant 0 : i32
    return %c0_i32, %c0_i32_0 : i32, i32
  }
  func.func @transform_6(%arg0: i32) -> (i32, i32) {
    %c0_i32 = arith.constant 0 : i32
    %c0_i32_0 = arith.constant 0 : i32
    %c0_i32_1 = arith.constant 0 : i32
    return %c0_i32, %c0_i32_0 : i32, i32
  }
  func.func @transform_7(%arg0: i32) -> (i32, i32) {
    %c0_i32 = arith.constant 0 : i32
    %c0_i32_0 = arith.constant 0 : i32
    %c0_i32_1 = arith.constant 0 : i32
    return %c0_i32, %c0_i32_0 : i32, i32
  }
  func.func @transform_8(%arg0: i32) -> (i32, i32) {
    %c0_i32 = arith.constant 0 : i32
    %c0_i32_0 = arith.constant 0 : i32
    %c0_i32_1 = arith.constant 0 : i32
    return %c0_i32, %c0_i32_0 : i32, i32
  }
  func.func @transform_9(%arg0: i32) -> (i32, i32) {
    %c0_i32 = arith.constant 0 : i32
    %c0_i32_0 = arith.constant 0 : i32
    return %c0_i32, %arg0 : i32, i32
  }
}

</mosaic_0001>

<llo_original>
// kernel: dde_net_fc_forward.1
$region0: #{dde_net_fc_forward.1}
  #allocation0 [shape = 'u32[]', space=smem, size = 0x4, offset = 0x4, fixed_abs, tag = 'smem constant byte address 0x4 - core index']
  #allocation1 [shape = 'u32[144,128]{1,0:T(1,128)}', space=vmem, size = 0x12000, scoped, tag = 'internal scratch']
  %s0 = inlined_call_operand.vmem [shape: f32[16,128], index: 0, kind: input, shape index: {}]
  %s1 = inlined_call_operand.vmem [shape: f32[32,16], index: 1, kind: input, shape index: {}]
  %s2 = inlined_call_operand.vmem [shape: f32[32,1], index: 2, kind: input, shape index: {}]
  %s3 = inlined_call_operand.vmem [shape: f32[32,32], index: 3, kind: input, shape index: {}]
  %s4 = inlined_call_operand.vmem [shape: f32[32,1], index: 4, kind: input, shape index: {}]
  %s5 = inlined_call_operand.vmem [shape: f32[32,32], index: 5, kind: input, shape index: {}]
  %s6 = inlined_call_operand.vmem [shape: f32[32,1], index: 6, kind: input, shape index: {}]
  %s7 = inlined_call_operand.vmem [shape: f32[4,32], index: 7, kind: input, shape index: {}]
  %s8 = inlined_call_operand.vmem [shape: f32[4,1], index: 8, kind: input, shape index: {}]
  %s9 = inlined_call_operand.hbm [shape: f32[4,128], index: 9, kind: output, shape index: {}]
  %s10 = sld [smem:[#allocation0]]
  $region46: #{dde_net_fc_forward.1} parent=0
    _
  %s12 = ssub.s32 1, %s10
  %s13 = scalar_select 0, %s12, %s10
  $region1: #{dde_net_fc_forward.1} parent=0
    #allocation2 [shape = 'u8[2048]{0}', space=vmem, size = 0x800, scoped, tag = 'output window, operand 0, single buffered']
    #allocation3 [shape = 's32[1]{0}', space=sflag, size = 0x4, scoped, tag = 'scoped memory for dde_net_fc_forward.1']
    %14 = vsyncpa [#allocation3], 0
    // Predicated region
    $region2: #{dde_net_fc_forward.1} parent=1 // pred_check
      _
    $region3: #{dde_net_fc_forward.1} parent=1 // pred_check_branch
      %16 = sbr.rel (0) target = $region5
    $region4: #{dde_net_fc_forward.1} parent=1 // pred_region
      _
    $region5: #{dde_net_fc_forward.1} parent=1 // pred_fallthru
      _
    // Predicated region
    $region6: #{dde_net_fc_forward.1} parent=1 // pred_check
      _
    $region7: #{dde_net_fc_forward.1} parent=1 // pred_check_branch
      %18 = sbr.rel (0) target = $region9
    $region8: #{dde_net_fc_forward.1} parent=1 // pred_region
      _
    $region9: #{dde_net_fc_forward.1} parent=1 // pred_fallthru
      _
    // Predicated region
    $region10: #{dde_net_fc_forward.1} parent=1 // pred_check
      _
    $region11: #{dde_net_fc_forward.1} parent=1 // pred_check_branch
      %20 = sbr.rel (0) target = $region13
    $region12: #{dde_net_fc_forward.1} parent=1 // pred_region
      _
    $region13: #{dde_net_fc_forward.1} parent=1 // pred_fallthru
      _
    // Predicated region
    $region14: #{dde_net_fc_forward.1} parent=1 // pred_check
      _
    $region15: #{dde_net_fc_forward.1} parent=1 // pred_check_branch
      %22 = sbr.rel (0) target = $region17
    $region16: #{dde_net_fc_forward.1} parent=1 // pred_region
      _
    $region17: #{dde_net_fc_forward.1} parent=1 // pred_fallthru
      _
    // Predicated region
    $region18: #{dde_net_fc_forward.1} parent=1 // pred_check
      _
    $region19: #{dde_net_fc_forward.1} parent=1 // pred_check_branch
      %24 = sbr.rel (0) target = $region21
    $region20: #{dde_net_fc_forward.1} parent=1 // pred_region
      _
    $region21: #{dde_net_fc_forward.1} parent=1 // pred_fallthru
      _
    // Predicated region
    $region22: #{dde_net_fc_forward.1} parent=1 // pred_check
      _
    $region23: #{dde_net_fc_forward.1} parent=1 // pred_check_branch
      %26 = sbr.rel (0) target = $region25
    $region24: #{dde_net_fc_forward.1} parent=1 // pred_region
      _
    $region25: #{dde_net_fc_forward.1} parent=1 // pred_fallthru
      _
    // Predicated region
    $region26: #{dde_net_fc_forward.1} parent=1 // pred_check
      _
    $region27: #{dde_net_fc_forward.1} parent=1 // pred_check_branch
      %28 = sbr.rel (0) target = $region29
    $region28: #{dde_net_fc_forward.1} parent=1 // pred_region
      _
    $region29: #{dde_net_fc_forward.1} parent=1 // pred_fallthru
      _
    // Predicated region
    $region30: #{dde_net_fc_forward.1} parent=1 // pred_check
      _
    $region31: #{dde_net_fc_forward.1} parent=1 // pred_check_branch
      %30 = sbr.rel (0) target = $region33
    $region32: #{dde_net_fc_forward.1} parent=1 // pred_region
      _
    $region33: #{dde_net_fc_forward.1} parent=1 // pred_fallthru
      _
    // Predicated region
    $region34: #{dde_net_fc_forward.1} parent=1 // pred_check
      _
    $region35: #{dde_net_fc_forward.1} parent=1 // pred_check_branch
      %32 = sbr.rel (0) target = $region37
    $region36: #{dde_net_fc_forward.1} parent=1 // pred_region
      _
    $region37: #{dde_net_fc_forward.1} parent=1 // pred_fallthru
      _
    %v33 = vld [vmem:[%s1] sm:$0xff]
    %v34 = vld [vmem:[%s1 + $0x8] sm:$0xff]
    %v35 = vld [vmem:[%s1 + $0x10] sm:$0xff]
    %v36 = vld [vmem:[%s1 + $0x18] sm:$0xff]
    %v37 = vld [vmem:[%s0] sm:$0xff]
    %v38 = vld [vmem:[%s0 + $0x8] sm:$0xff]
    %v39 = vld [vmem:[%s2] sm:$0xff]
    %v40 = vld [vmem:[%s2 + $0x8] sm:$0xff]
    %v41 = vld [vmem:[%s2 + $0x10] sm:$0xff]
    %v42 = vld [vmem:[%s2 + $0x18] sm:$0xff]
    %44 = vset.pattern.permute.xlu0 0
    %45 = vperm.xlu0 %44, %v39
    %v46 = vpop.permute.xlu0 %45
    %49 = vset.pattern.permute.xlu0 0
    %50 = vperm.xlu0 %49, %v40
    %v51 = vpop.permute.xlu0 %50
    %54 = vset.pattern.permute.xlu0 0
    %55 = vperm.xlu0 %54, %v41
    %v56 = vpop.permute.xlu0 %55
    %59 = vset.pattern.permute.xlu0 0
    %60 = vperm.xlu0 %59, %v42
    %v61 = vpop.permute.xlu0 %60
    %vm63 = vcmask 130048
    %v65 = vsel %vm63, %v33, 0
    %v68 = vsel %vm63, %v34, 0
    %v71 = vsel %vm63, %v35, 0
    %v74 = vsel %vm63, %v36, 0
    %76 = vmatprep.subr.mxu0 0.0
    %77 = vmatpush1.msra.mxu0 0.0
    %78 = vmatprep.subr.mxu0 0.0
    %79 = vmatpush1.msra.mxu0 0.0
    %80 = vmatprep.subr.mxu0 0.0
    %81 = vmatpush1.msra.mxu0 0.0
    %82 = vmatprep.subr.mxu0 0.0
    %83 = vmatpush1.msra.mxu0 0.0
    %84 = vmatprep.subr.mxu0 0.0
    %85 = vmatpush1.msra.mxu0 0.0
    %86 = vmatprep.subr.mxu0 0.0
    %87 = vmatpush1.msra.mxu0 0.0
    %88 = vmatprep.subr.mxu0 0.0
    %89 = vmatpush1.msra.mxu0 0.0
    %90 = vmatprep.subr.mxu0 0.0
    %91 = vmatpush1.msra.mxu0 0.0
    %92 = vmatprep.subr.mxu0 0.0
    %93 = vmatpush1.msra.mxu0 0.0
    %94 = vmatprep.subr.mxu0 0.0
    %95 = vmatpush1.msra.mxu0 0.0
    %96 = vmatprep.subr.mxu0 0.0
    %97 = vmatpush1.msra.mxu0 0.0
    %98 = vmatprep.subr.mxu0 0.0
    %99 = vmatpush1.msra.mxu0 0.0
    %100 = vmatprep.subr.mxu0 0.0
    %101 = vmatpush1.msra.mxu0 0.0
    %102 = vmatprep.subr.mxu0 0.0
    %103 = vmatpush1.msra.mxu0 0.0
    %104 = vmatprep.subr.mxu0 0.0
    %105 = vmatpush1.msra.mxu0 %v38
    %106 = vmatprep.subr.mxu0 0.0
    %107 = vmatpush1.msra.mxu0 %v37
    %108 = vmatprep.subr.mxu0 0.0
    %109 = vmatpush2.msra.mxu0 0.0
    %110 = vmatprep.subr.mxu0 0.0
    %111 = vmatpush2.msra.mxu0 0.0
    %112 = vmatprep.subr.mxu0 0.0
    %113 = vmatpush2.msra.mxu0 0.0
    %114 = vmatprep.subr.mxu0 0.0
    %115 = vmatpush2.msra.mxu0 0.0
    %116 = vmatprep.subr.mxu0 0.0
    %117 = vmatpush2.msra.mxu0 0.0
    %118 = vmatprep.subr.mxu0 0.0
    %119 = vmatpush2.msra.mxu0 0.0
    %120 = vmatprep.subr.mxu0 0.0
    %121 = vmatpush2.msra.mxu0 0.0
    %122 = vmatprep.subr.mxu0 0.0
    %123 = vmatpush2.msra.mxu0 0.0
    %124 = vmatprep.subr.mxu0 0.0
    %125 = vmatpush2.msra.mxu0 0.0
    %126 = vmatprep.subr.mxu0 0.0
    %127 = vmatpush2.msra.mxu0 0.0
    %128 = vmatprep.subr.mxu0 0.0
    %129 = vmatpush2.msra.mxu0 0.0
    %130 = vmatprep.subr.mxu0 0.0
    %131 = vmatpush2.msra.mxu0 0.0
    %132 = vmatprep.subr.mxu0 0.0
    %133 = vmatpush2.msra.mxu0 0.0
    %134 = vmatprep.subr.mxu0 0.0
    %135 = vmatpush2.msra.mxu0 0.0
    %136 = vmatprep.subr.mxu0 0.0
    %137 = vmatpush2.msra.mxu0 0.0
    %138 = vmatprep.subr.mxu0 0.0
    %139 = vmatpush2.msra.mxu0 0.0
    %140 = vmatprep.mubr.f32.mxu0 0.0
    %141 = vmatmul.mubr.f32.gmra.mxu0 %v65
    %v142 = vpop.f32.mrf.mxu0
    %v143 = vadd.f32 %v46, %v142
    %v144 = vpop.f32.mrf.mxu0
    %145 = vmatprep.mubr.f32.mxu0 0.0
    %146 = vmatmul.mubr.f32.gmra.mxu0 %v68
    %v147 = vpop.f32.mrf.mxu0
    %v148 = vadd.f32 %v51, %v147
    %v149 = vpop.f32.mrf.mxu0
    %150 = vmatprep.mubr.f32.mxu0 0.0
    %151 = vmatmul.mubr.f32.gmra.mxu0 %v71
    %v152 = vpop.f32.mrf.mxu0
    %v153 = vadd.f32 %v56, %v152
    %v154 = vpop.f32.mrf.mxu0
    %155 = vmatprep.mubr.f32.mxu0 0.0
    %156 = vmatmul.mubr.f32.gmra.mxu0 %v74
    %v157 = vpop.f32.mrf.mxu0
    %v158 = vadd.f32 %v61, %v157
    %v159 = vpop.f32.mrf.mxu0
    %160 = vdwg.mxu0
    %v161 = vmax.f32 %v143, 0.0
    %v162 = vmax.f32 %v148, 0.0
    %v163 = vmax.f32 %v153, 0.0
    %v164 = vmax.f32 %v158, 0.0
    %v165 = vld [vmem:[%s3] sm:$0xff]
    %v166 = vld [vmem:[%s3 + $0x8] sm:$0xff]
    %v167 = vld [vmem:[%s3 + $0x10] sm:$0xff]
    %v168 = vld [vmem:[%s3 + $0x18] sm:$0xff]
    %v169 = vld [vmem:[%s4] sm:$0xff]
    %v170 = vld [vmem:[%s4 + $0x8] sm:$0xff]
    %v171 = vld [vmem:[%s4 + $0x10] sm:$0xff]
    %v172 = vld [vmem:[%s4 + $0x18] sm:$0xff]
    %174 = vset.pattern.permute.xlu0 0
    %175 = vperm.xlu0 %174, %v169
    %v176 = vpop.permute.xlu0 %175
    %179 = vset.pattern.permute.xlu0 0
    %180 = vperm.xlu0 %179, %v170
    %v181 = vpop.permute.xlu0 %180
    %184 = vset.pattern.permute.xlu0 0
    %185 = vperm.xlu0 %184, %v171
    %v186 = vpop.permute.xlu0 %185
    %189 = vset.pattern.permute.xlu0 0
    %190 = vperm.xlu0 %189, %v172
    %v191 = vpop.permute.xlu0 %190
    %vm193 = vcmask 261120
    %v195 = vsel %vm193, %v165, 0
    %v198 = vsel %vm193, %v166, 0
    %v201 = vsel %vm193, %v167, 0
    %v204 = vsel %vm193, %v168, 0
    %206 = vmatprep.subr.mxu0 0.0
    %207 = vmatpush1.msra.mxu0 0.0
    %208 = vmatprep.subr.mxu0 0.0
    %209 = vmatpush1.msra.mxu0 0.0
    %210 = vmatprep.subr.mxu0 0.0
    %211 = vmatpush1.msra.mxu0 0.0
    %212 = vmatprep.subr.mxu0 0.0
    %213 = vmatpush1.msra.mxu0 0.0
    %214 = vmatprep.subr.mxu0 0.0
    %215 = vmatpush1.msra.mxu0 0.0
    %216 = vmatprep.subr.mxu0 0.0
    %217 = vmatpush1.msra.mxu0 0.0
    %218 = vmatprep.subr.mxu0 0.0
    %219 = vmatpush1.msra.mxu0 0.0
    %220 = vmatprep.subr.mxu0 0.0
    %221 = vmatpush1.msra.mxu0 0.0
    %222 = vmatprep.subr.mxu0 0.0
    %223 = vmatpush1.msra.mxu0 0.0
    %224 = vmatprep.subr.mxu0 0.0
    %225 = vmatpush1.msra.mxu0 0.0
    %226 = vmatprep.subr.mxu0 0.0
    %227 = vmatpush1.msra.mxu0 0.0
    %228 = vmatprep.subr.mxu0 0.0
    %229 = vmatpush1.msra.mxu0 0.0
    %230 = vmatprep.subr.mxu0 0.0
    %231 = vmatpush1.msra.mxu0 %v164
    %232 = vmatprep.subr.mxu0 0.0
    %233 = vmatpush1.msra.mxu0 %v163
    %234 = vmatprep.subr.mxu0 0.0
    %235 = vmatpush1.msra.mxu0 %v162
    %236 = vmatprep.subr.mxu0 0.0
    %237 = vmatpush1.msra.mxu0 %v161
    %238 = vmatprep.subr.mxu0 0.0
    %239 = vmatpush2.msra.mxu0 0.0
    %240 = vmatprep.subr.mxu0 0.0
    %241 = vmatpush2.msra.mxu0 0.0
    %242 = vmatprep.subr.mxu0 0.0
    %243 = vmatpush2.msra.mxu0 0.0
    %244 = vmatprep.subr.mxu0 0.0
    %245 = vmatpush2.msra.mxu0 0.0
    %246 = vmatprep.subr.mxu0 0.0
    %247 = vmatpush2.msra.mxu0 0.0
    %248 = vmatprep.subr.mxu0 0.0
    %249 = vmatpush2.msra.mxu0 0.0
    %250 = vmatprep.subr.mxu0 0.0
    %251 = vmatpush2.msra.mxu0 0.0
    %252 = vmatprep.subr.mxu0 0.0
    %253 = vmatpush2.msra.mxu0 0.0
    %254 = vmatprep.subr.mxu0 0.0
    %255 = vmatpush2.msra.mxu0 0.0
    %256 = vmatprep.subr.mxu0 0.0
    %257 = vmatpush2.msra.mxu0 0.0
    %258 = vmatprep.subr.mxu0 0.0
    %259 = vmatpush2.msra.mxu0 0.0
    %260 = vmatprep.subr.mxu0 0.0
    %261 = vmatpush2.msra.mxu0 0.0
    %262 = vmatprep.subr.mxu0 0.0
    %263 = vmatpush2.msra.mxu0 0.0
    %264 = vmatprep.subr.mxu0 0.0
    %265 = vmatpush2.msra.mxu0 0.0
    %266 = vmatprep.subr.mxu0 0.0
    %267 = vmatpush2.msra.mxu0 0.0
    %268 = vmatprep.subr.mxu0 0.0
    %269 = vmatpush2.msra.mxu0 0.0
    %270 = vmatprep.mubr.f32.mxu0 0.0
    %271 = vmatmul.mubr.f32.gmra.mxu0 %v195
    %v272 = vpop.f32.mrf.mxu0
    %v273 = vadd.f32 %v176, %v272
    %v274 = vpop.f32.mrf.mxu0
    %275 = vmatprep.mubr.f32.mxu0 0.0
    %276 = vmatmul.mubr.f32.gmra.mxu0 %v198
    %v277 = vpop.f32.mrf.mxu0
    %v278 = vadd.f32 %v181, %v277
    %v279 = vpop.f32.mrf.mxu0
    %280 = vmatprep.mubr.f32.mxu0 0.0
    %281 = vmatmul.mubr.f32.gmra.mxu0 %v201
    %v282 = vpop.f32.mrf.mxu0
    %v283 = vadd.f32 %v186, %v282
    %v284 = vpop.f32.mrf.mxu0
    %285 = vmatprep.mubr.f32.mxu0 0.0
    %286 = vmatmul.mubr.f32.gmra.mxu0 %v204
    %v287 = vpop.f32.mrf.mxu0
    %v288 = vadd.f32 %v191, %v287
    %v289 = vpop.f32.mrf.mxu0
    %290 = vdwg.mxu0
    %v291 = vmax.f32 %v273, 0.0
    %v292 = vmax.f32 %v278, 0.0
    %v293 = vmax.f32 %v283, 0.0
    %v294 = vmax.f32 %v288, 0.0
    %v295 = vld [vmem:[%s5] sm:$0xff]
    %v296 = vld [vmem:[%s5 + $0x8] sm:$0xff]
    %v297 = vld [vmem:[%s5 + $0x10] sm:$0xff]
    %v298 = vld [vmem:[%s5 + $0x18] sm:$0xff]
    %v299 = vld [vmem:[%s6] sm:$0xff]
    %v300 = vld [vmem:[%s6 + $0x8] sm:$0xff]
    %v301 = vld [vmem:[%s6 + $0x10] sm:$0xff]
    %v302 = vld [vmem:[%s6 + $0x18] sm:$0xff]
    %304 = vset.pattern.permute.xlu0 0
    %305 = vperm.xlu0 %304, %v299
    %v306 = vpop.permute.xlu0 %305
    %309 = vset.pattern.permute.xlu0 0
    %310 = vperm.xlu0 %309, %v300
    %v311 = vpop.permute.xlu0 %310
    %314 = vset.pattern.permute.xlu0 0
    %315 = vperm.xlu0 %314, %v301
    %v316 = vpop.permute.xlu0 %315
    %319 = vset.pattern.permute.xlu0 0
    %320 = vperm.xlu0 %319, %v302
    %v321 = vpop.permute.xlu0 %320
    %v324 = vsel %vm193, %v295, 0
    %v327 = vsel %vm193, %v296, 0
    %v330 = vsel %vm193, %v297, 0
    %v333 = vsel %vm193, %v298, 0
    %335 = vmatprep.subr.mxu0 0.0
    %336 = vmatpush1.msra.mxu0 0.0
    %337 = vmatprep.subr.mxu0 0.0
    %338 = vmatpush1.msra.mxu0 0.0
    %339 = vmatprep.subr.mxu0 0.0
    %340 = vmatpush1.msra.mxu0 0.0
    %341 = vmatprep.subr.mxu0 0.0
    %342 = vmatpush1.msra.mxu0 0.0
    %343 = vmatprep.subr.mxu0 0.0
    %344 = vmatpush1.msra.mxu0 0.0
    %345 = vmatprep.subr.mxu0 0.0
    %346 = vmatpush1.msra.mxu0 0.0
    %347 = vmatprep.subr.mxu0 0.0
    %348 = vmatpush1.msra.mxu0 0.0
    %349 = vmatprep.subr.mxu0 0.0
    %350 = vmatpush1.msra.mxu0 0.0
    %351 = vmatprep.subr.mxu0 0.0
    %352 = vmatpush1.msra.mxu0 0.0
    %353 = vmatprep.subr.mxu0 0.0
    %354 = vmatpush1.msra.mxu0 0.0
    %355 = vmatprep.subr.mxu0 0.0
    %356 = vmatpush1.msra.mxu0 0.0
    %357 = vmatprep.subr.mxu0 0.0
    %358 = vmatpush1.msra.mxu0 0.0
    %359 = vmatprep.subr.mxu0 0.0
    %360 = vmatpush1.msra.mxu0 %v294
    %361 = vmatprep.subr.mxu0 0.0
    %362 = vmatpush1.msra.mxu0 %v293
    %363 = vmatprep.subr.mxu0 0.0
    %364 = vmatpush1.msra.mxu0 %v292
    %365 = vmatprep.subr.mxu0 0.0
    %366 = vmatpush1.msra.mxu0 %v291
    %367 = vmatprep.subr.mxu0 0.0
    %368 = vmatpush2.msra.mxu0 0.0
    %369 = vmatprep.subr.mxu0 0.0
    %370 = vmatpush2.msra.mxu0 0.0
    %371 = vmatprep.subr.mxu0 0.0
    %372 = vmatpush2.msra.mxu0 0.0
    %373 = vmatprep.subr.mxu0 0.0
    %374 = vmatpush2.msra.mxu0 0.0
    %375 = vmatprep.subr.mxu0 0.0
    %376 = vmatpush2.msra.mxu0 0.0
    %377 = vmatprep.subr.mxu0 0.0
    %378 = vmatpush2.msra.mxu0 0.0
    %379 = vmatprep.subr.mxu0 0.0
    %380 = vmatpush2.msra.mxu0 0.0
    %381 = vmatprep.subr.mxu0 0.0
    %382 = vmatpush2.msra.mxu0 0.0
    %383 = vmatprep.subr.mxu0 0.0
    %384 = vmatpush2.msra.mxu0 0.0
    %385 = vmatprep.subr.mxu0 0.0
    %386 = vmatpush2.msra.mxu0 0.0
    %387 = vmatprep.subr.mxu0 0.0
    %388 = vmatpush2.msra.mxu0 0.0
    %389 = vmatprep.subr.mxu0 0.0
    %390 = vmatpush2.msra.mxu0 0.0
    %391 = vmatprep.subr.mxu0 0.0
    %392 = vmatpush2.msra.mxu0 0.0
    %393 = vmatprep.subr.mxu0 0.0
    %394 = vmatpush2.msra.mxu0 0.0
    %395 = vmatprep.subr.mxu0 0.0
    %396 = vmatpush2.msra.mxu0 0.0
    %397 = vmatprep.subr.mxu0 0.0
    %398 = vmatpush2.msra.mxu0 0.0
    %399 = vmatprep.mubr.f32.mxu0 0.0
    %400 = vmatmul.mubr.f32.gmra.mxu0 %v324
    %v401 = vpop.f32.mrf.mxu0
    %v402 = vadd.f32 %v306, %v401
    %v403 = vpop.f32.mrf.mxu0
    %404 = vmatprep.mubr.f32.mxu0 0.0
    %405 = vmatmul.mubr.f32.gmra.mxu0 %v327
    %v406 = vpop.f32.mrf.mxu0
    %v407 = vadd.f32 %v311, %v406
    %v408 = vpop.f32.mrf.mxu0
    %409 = vmatprep.mubr.f32.mxu0 0.0
    %410 = vmatmul.mubr.f32.gmra.mxu0 %v330
    %v411 = vpop.f32.mrf.mxu0
    %v412 = vadd.f32 %v316, %v411
    %v413 = vpop.f32.mrf.mxu0
    %414 = vmatprep.mubr.f32.mxu0 0.0
    %415 = vmatmul.mubr.f32.gmra.mxu0 %v333
    %v416 = vpop.f32.mrf.mxu0
    %v417 = vadd.f32 %v321, %v416
    %v418 = vpop.f32.mrf.mxu0
    %419 = vdwg.mxu0
    %v420 = vmax.f32 %v402, 0.0
    %v421 = vmax.f32 %v407, 0.0
    %v422 = vmax.f32 %v412, 0.0
    %v423 = vmax.f32 %v417, 0.0
    %v424 = vld [vmem:[%s7] sm:$0xf]
    %v425 = vld [vmem:[%s8] sm:$0xf]
    %427 = vset.pattern.permute.xlu0 0
    %428 = vperm.xlu0 %427, %v425
    %v429 = vpop.permute.xlu0 %428
    %v432 = vsel %vm193, %v424, 0
    %434 = vmatprep.subr.mxu0 0.0
    %435 = vmatpush1.msra.mxu0 0.0
    %436 = vmatprep.subr.mxu0 0.0
    %437 = vmatpush1.msra.mxu0 0.0
    %438 = vmatprep.subr.mxu0 0.0
    %439 = vmatpush1.msra.mxu0 0.0
    %440 = vmatprep.subr.mxu0 0.0
    %441 = vmatpush1.msra.mxu0 0.0
    %442 = vmatprep.subr.mxu0 0.0
    %443 = vmatpush1.msra.mxu0 0.0
    %444 = vmatprep.subr.mxu0 0.0
    %445 = vmatpush1.msra.mxu0 0.0
    %446 = vmatprep.subr.mxu0 0.0
    %447 = vmatpush1.msra.mxu0 0.0
    %448 = vmatprep.subr.mxu0 0.0
    %449 = vmatpush1.msra.mxu0 0.0
    %450 = vmatprep.subr.mxu0 0.0
    %451 = vmatpush1.msra.mxu0 0.0
    %452 = vmatprep.subr.mxu0 0.0
    %453 = vmatpush1.msra.mxu0 0.0
    %454 = vmatprep.subr.mxu0 0.0
    %455 = vmatpush1.msra.mxu0 0.0
    %456 = vmatprep.subr.mxu0 0.0
    %457 = vmatpush1.msra.mxu0 0.0
    %458 = vmatprep.subr.mxu0 0.0
    %459 = vmatpush1.msra.mxu0 %v423
    %460 = vmatprep.subr.mxu0 0.0
    %461 = vmatpush1.msra.mxu0 %v422
    %462 = vmatprep.subr.mxu0 0.0
    %463 = vmatpush1.msra.mxu0 %v421
    %464 = vmatprep.subr.mxu0 0.0
    %465 = vmatpush1.msra.mxu0 %v420
    %466 = vmatprep.subr.mxu0 0.0
    %467 = vmatpush2.msra.mxu0 0.0
    %468 = vmatprep.subr.mxu0 0.0
    %469 = vmatpush2.msra.mxu0 0.0
    %470 = vmatprep.subr.mxu0 0.0
    %471 = vmatpush2.msra.mxu0 0.0
    %472 = vmatprep.subr.mxu0 0.0
    %473 = vmatpush2.msra.mxu0 0.0
    %474 = vmatprep.subr.mxu0 0.0
    %475 = vmatpush2.msra.mxu0 0.0
    %476 = vmatprep.subr.mxu0 0.0
    %477 = vmatpush2.msra.mxu0 0.0
    %478 = vmatprep.subr.mxu0 0.0
    %479 = vmatpush2.msra.mxu0 0.0
    %480 = vmatprep.subr.mxu0 0.0
    %481 = vmatpush2.msra.mxu0 0.0
    %482 = vmatprep.subr.mxu0 0.0
    %483 = vmatpush2.msra.mxu0 0.0
    %484 = vmatprep.subr.mxu0 0.0
    %485 = vmatpush2.msra.mxu0 0.0
    %486 = vmatprep.subr.mxu0 0.0
    %487 = vmatpush2.msra.mxu0 0.0
    %488 = vmatprep.subr.mxu0 0.0
    %489 = vmatpush2.msra.mxu0 0.0
    %490 = vmatprep.subr.mxu0 0.0
    %491 = vmatpush2.msra.mxu0 0.0
    %492 = vmatprep.subr.mxu0 0.0
    %493 = vmatpush2.msra.mxu0 0.0
    %494 = vmatprep.subr.mxu0 0.0
    %495 = vmatpush2.msra.mxu0 0.0
    %496 = vmatprep.subr.mxu0 0.0
    %497 = vmatpush2.msra.mxu0 0.0
    %498 = vmatprep.mubr.f32.mxu0 0.0
    %499 = vmatmul.mubr.f32.gmra.mxu0 %v432
    %v500 = vpop.f32.mrf.mxu0
    %v501 = vadd.f32 %v429, %v500
    %v502 = vpop.f32.mrf.mxu0
    %503 = vdwg.mxu0
    %504 = vst [vmem:[#allocation2] sm:$0xf] %v501
    // Predicated region
    $region38: #{dde_net_fc_forward.1} parent=1 // pred_check
      _
    $region39: #{dde_net_fc_forward.1} parent=1 // pred_check_branch
      %506 = sbr.rel (0) target = $region41
    $region40: #{dde_net_fc_forward.1} parent=1 // pred_region
      %s508 = ssub.s32 64, 64
      %509 = vsyncadd [#allocation3], %s508
      %s511 = sshll.u32 [#allocation2], 4
      %s512 = int_to_ptr.vmem [resolvable:$true] %s511
      %514 = dma.vmem_to_hbm [thread:$0]  %s512, 64, %s9, [#allocation3]
    $region41: #{dde_net_fc_forward.1} parent=1 // pred_fallthru
      _
    // Predicated region
    $region42: #{dde_net_fc_forward.1} parent=1 // pred_check
      _
    $region43: #{dde_net_fc_forward.1} parent=1 // pred_check_branch
      %516 = sbr.rel (0) target = $region45
    $region44: #{dde_net_fc_forward.1} parent=1 // pred_region
      %517 = dma.done [#allocation3], 64
    $region45: #{dde_net_fc_forward.1} parent=1 // pred_fallthru
      _
    %518 = vsyncpa [#allocation3], 1

</llo_original>
